<compile_context>
chip_gen: v6e
topology: v6e:2x2x1
jax: 0.10.0
libtpu: 0.0.40
codegen_flags: <defaults>
</compile_context>

<pallas_src>
import functools
import math

import jax
import jax.numpy as jnp
from jax.experimental import pallas as pl
from jax.experimental.pallas import tpu as pltpu


# ------------------------------ small helpers ------------------------------

def _round_up(x, m):
    return ((x + m - 1) // m) * m


def _pick_tile(dim, max_tile):
    # Full-dim block when it fits (no padding; satisfies the "block == full
    # array dim" layout rule even for tiny/odd dims such as M=2 pooled rows);
    # otherwise an aligned fixed tile and the caller zero-pads up to it.
    return dim if dim <= max_tile else max_tile


_LINEAR_VMEM_LIMIT = 32 * 1024 * 1024  # fits v5e/v6e/v7x; ~12 MiB actually used


# ---------------------- tiled linear (+bias, GELU, residual) ----------------

def _linear_kernel(*refs, act, has_bias, has_res):
    it = iter(refs)
    x_ref = next(it)
    w_ref = next(it)
    b_ref = next(it) if has_bias else None
    r_ref = next(it) if has_res else None
    o_ref = next(it)
    acc_ref = next(it)
    k = pl.program_id(2)

    @pl.when(k == 0)
    def _():
        acc_ref[...] = jnp.zeros_like(acc_ref)

    a = x_ref[...]
    if a.dtype != jnp.bfloat16:      # in-kernel cast: no wrapper HBM round trip
        a = a.astype(jnp.bfloat16)
    acc_ref[...] += jnp.dot(a, w_ref[...], preferred_element_type=jnp.float32)

    @pl.when(k == pl.num_programs(2) - 1)
    def _():
        out = acc_ref[...]
        if has_bias:
            out = out + b_ref[...]
        if act == "gelu":  # exact (erf) GELU == nn.GELU(approximate='none'), in f32
            out = 0.5 * out * (1.0 + jax.lax.erf(out * (1.0 / math.sqrt(2.0))))
        if has_res:
            out = out + r_ref[...].astype(jnp.float32)
        o_ref[...] = out.astype(o_ref.dtype)


def pallas_linear(x, w, b=None, act=None, residual=None, out_dtype=jnp.bfloat16,
                  tm_max=512, tk_max=1024, tn_max=1024):
    """out = act(x @ w + b) [+ residual].  bf16 MXU operands, f32 accumulation."""
    M, K = x.shape
    Kw, N = w.shape
    assert Kw == K
    tm = _pick_tile(M, tm_max)
    tk = _pick_tile(K, tk_max)
    tn = _pick_tile(N, tn_max)
    Mp, Kp, Np = _round_up(M, tm), _round_up(K, tk), _round_up(N, tn)

    xb = x
    if (Mp, Kp) != (M, K):
        xb = jnp.pad(xb, ((0, Mp - M), (0, Kp - K)))
    wb = w if w.dtype == jnp.bfloat16 else w.astype(jnp.bfloat16)
    if (Kp, Np) != (K, N):
        wb = jnp.pad(wb, ((0, Kp - K), (0, Np - N)))

    inputs = [xb, wb]
    in_specs = [
        pl.BlockSpec((tm, tk), lambda i, j, k: (i, k)),
        pl.BlockSpec((tk, tn), lambda i, j, k: (k, j)),
    ]
    has_bias = b is not None
    if has_bias:
        bb = b.reshape(1, -1).astype(jnp.float32)
        if Np != N:
            bb = jnp.pad(bb, ((0, 0), (0, Np - N)))
        inputs.append(bb)
        in_specs.append(pl.BlockSpec((1, tn), lambda i, j, k: (0, j)))
    has_res = residual is not None
    if has_res:
        r = residual                       # bf16, fused in the epilogue
        if (Mp, Np) != (M, N):
            r = jnp.pad(r, ((0, Mp - M), (0, Np - N)))
        inputs.append(r)
        # k-invariant block index -> pipeline keeps the tile resident across k
        in_specs.append(pl.BlockSpec((tm, tn), lambda i, j, k: (i, j)))

    out = pl.pallas_call(
        functools.partial(_linear_kernel, act=act, has_bias=has_bias,
                          has_res=has_res),
        out_shape=jax.ShapeDtypeStruct((Mp, Np), out_dtype),
        grid=(Mp // tm, Np // tn, Kp // tk),
        in_specs=in_specs,
        out_specs=pl.BlockSpec((tm, tn), lambda i, j, k: (i, j)),
        scratch_shapes=[pltpu.VMEM((tm, tn), jnp.float32)],
        compiler_params=pltpu.CompilerParams(
            dimension_semantics=("parallel", "parallel", "arbitrary"),
            vmem_limit_bytes=_LINEAR_VMEM_LIMIT),
    )(*inputs)
    if (Mp, Np) != (M, N):
        out = out[:M, :N]
    return out


# ------------------------------ LayerNorm (row-tiled) ------------------------

def _layernorm_kernel(x_ref, g_ref, b_ref, o_ref, *, eps):
    x = x_ref[...].astype(jnp.float32)        # stats in f32
    mu = jnp.mean(x, axis=-1, keepdims=True)
    var = jnp.mean(jnp.square(x - mu), axis=-1, keepdims=True)
    y = (x - mu) * jax.lax.rsqrt(var + eps) * g_ref[...] + b_ref[...]
    o_ref[...] = y.astype(o_ref.dtype)


def pallas_layernorm(x, g, b, eps=1e-5, out_dtype=jnp.bfloat16, tm_max=512):
    M, D = x.shape
    tm = _pick_tile(M, tm_max)
    Mp = _round_up(M, tm)
    xb = x if Mp == M else jnp.pad(x, ((0, Mp - M), (0, 0)))
    out = pl.pallas_call(
        functools.partial(_layernorm_kernel, eps=eps),
        out_shape=jax.ShapeDtypeStruct((Mp, D), out_dtype),
        grid=(Mp // tm,),
        in_specs=[
            pl.BlockSpec((tm, D), lambda i: (i, 0)),
            pl.BlockSpec((1, D), lambda i: (0, 0)),
            pl.BlockSpec((1, D), lambda i: (0, 0)),
        ],
        out_specs=pl.BlockSpec((tm, D), lambda i: (i, 0)),
        compiler_params=pltpu.CompilerParams(dimension_semantics=("parallel",)),
    )(xb, g, b)
    return out[:M] if Mp != M else out


# --------------------------- attention ((batch*head) grid) -------------------

def _attn_kernel(q_ref, k_ref, v_ref, o_ref, *, scale, causal):
    q = q_ref[0]                               # (L, Dh) bf16, lane-aligned
    k = k_ref[0]
    v = v_ref[0]
    # scores in f32; 1/sqrt(d) applied to the f32 scores (fp32 scaling parity)
    s = jax.lax.dot_general(q, k, (((1,), (1,)), ((), ())),
                            preferred_element_type=jnp.float32) * scale
    if causal:
        # In-kernel causal mask: iota + where, no HBM mask DMA.
        L = s.shape[0]
        row = jax.lax.broadcasted_iota(jnp.int32, (L, L), 0)
        col = jax.lax.broadcasted_iota(jnp.int32, (L, L), 1)
        s = jnp.where(col <= row, s, jnp.float32(-1e30))
    s = s - jnp.max(s, axis=-1, keepdims=True)
    p = jnp.exp(s)
    p = p / jnp.sum(p, axis=-1, keepdims=True)   # exact softmax (torch parity)
    # TODO(synk): head_dim<128 under-fills the 256-wide MXU on v6e/v7x; packing
    # multiple heads per dot would raise MXU utilization further.
    o_ref[0] = jnp.dot(p.astype(jnp.bfloat16), v,
                       preferred_element_type=jnp.float32).astype(o_ref.dtype)


def pallas_attention(q, k, v, scale, causal):
    """q/k/v: (N*H, L, Dh) bf16; one (batch, head) pair per grid step."""
    B, L, Dh = q.shape
    return pl.pallas_call(
        functools.partial(_attn_kernel, scale=scale, causal=causal),
        out_shape=jax.ShapeDtypeStruct((B, L, Dh), jnp.bfloat16),
        grid=(B,),
        in_specs=[pl.BlockSpec((1, L, Dh), lambda b: (b, 0, 0))] * 3,
        out_specs=pl.BlockSpec((1, L, Dh), lambda b: (b, 0, 0)),  # lane-dense
        compiler_params=pltpu.CompilerParams(dimension_semantics=("parallel",)),
    )(q, k, v)


# ------------------------------ L2 normalize --------------------------------

def _l2norm_kernel(x_ref, o_ref, *, eps):
    x = x_ref[...].astype(jnp.float32)
    n = jnp.sqrt(jnp.sum(x * x, axis=-1, keepdims=True))
    o_ref[...] = (x / jnp.maximum(n, eps)).astype(o_ref.dtype)


def pallas_l2_normalize(x, eps=1e-12, tm_max=512):
    M, D = x.shape
    tm = _pick_tile(M, tm_max)
    Mp = _round_up(M, tm)
    xb = x if Mp == M else jnp.pad(x, ((0, Mp - M), (0, 0)))
    out = pl.pallas_call(
        functools.partial(_l2norm_kernel, eps=eps),
        out_shape=jax.ShapeDtypeStruct((Mp, D), jnp.float32),
        grid=(Mp // tm,),
        in_specs=[pl.BlockSpec((tm, D), lambda i: (i, 0))],
        out_specs=pl.BlockSpec((tm, D), lambda i: (i, 0)),
        compiler_params=pltpu.CompilerParams(dimension_semantics=("parallel",)),
    )(xb)
    return out[:M] if Mp != M else out


# --------------------------- Transformer blocks ---------------------------

def _residual_block(x, p, heads, causal):
    N, L, D = x.shape
    Dh = D // heads
    x2 = x.reshape(N * L, D)                                      # bf16
    # --- attention sub-block ---
    h = pallas_layernorm(x2, p["ln1_g"], p["ln1_b"])
    qkv = pallas_linear(h, p["qkv_w"], p["qkv_b"])                # (N*L, 3D) bf16
    qkv = qkv.reshape(N, L, 3, heads, Dh)
    q = qkv[:, :, 0].transpose(0, 2, 1, 3).reshape(N * heads, L, Dh)
    k = qkv[:, :, 1].transpose(0, 2, 1, 3).reshape(N * heads, L, Dh)
    v = qkv[:, :, 2].transpose(0, 2, 1, 3).reshape(N * heads, L, Dh)
    attn = pallas_attention(q, k, v, scale=1.0 / math.sqrt(Dh), causal=causal)
    attn = attn.reshape(N, heads, L, Dh).transpose(0, 2, 1, 3).reshape(N * L, D)
    x2 = pallas_linear(attn, p["out_w"], p["out_b"], residual=x2)  # fused residual
    # --- MLP sub-block ---
    h = pallas_layernorm(x2, p["ln2_g"], p["ln2_b"])
    h = pallas_linear(h, p["fc1_w"], p["fc1_b"], act="gelu")
    x2 = pallas_linear(h, p["fc2_w"], p["fc2_b"], residual=x2)     # fused residual
    return x2.reshape(N, L, D)


# ------------------------------ Towers / CLIP ------------------------------

def encode_image(image, vp, cfg):
    # image: (N, C, H, W)  -- NCHW like PyTorch
    N, C, H, W = image.shape
    p = cfg["patch_size"]
    D = cfg["width"]
    gh, gw = H // p, W // p
    # conv1 (stride=patch, kernel=patch, no bias) == patch unfold + matmul
    patches = image.reshape(N, C, gh, p, gw, p).transpose(0, 2, 4, 1, 3, 5)
    patches = patches.reshape(N * gh * gw, C * p * p)
    x = pallas_linear(patches, vp["patch_w"]).reshape(N, gh * gw, D)   # bf16
    cls = jnp.broadcast_to(vp["cls"].reshape(1, 1, D), (N, 1, D))
    x = jnp.concatenate([cls, x], axis=1)             # (N, L, D)
    x = x + vp["pos"]                                 # learnable pos embed (bf16)
    L = x.shape[1]
    x = pallas_layernorm(x.reshape(N * L, D), vp["ln_pre_g"], vp["ln_pre_b"]
                         ).reshape(N, L, D)
    for blk in vp["blocks"]:
        x = _residual_block(x, blk, cfg["heads"], causal=False)   # no mask in ViT
    x = pallas_layernorm(x.reshape(N * L, D), vp["ln_post_g"], vp["ln_post_b"]
                         ).reshape(N, L, D)
    pooled = x[:, 0]                                  # pool_type='tok'
    pooled = pallas_linear(pooled, vp["proj"], out_dtype=jnp.float32)  # (N, E)
    return pooled


def encode_text(text, tp, cfg):
    # text: (N, L) int32 token ids
    N, L = text.shape
    D = cfg["width"]
    x = tp["tok_emb"][text]                           # embedding lookup (glue, bf16)
    x = x + tp["pos"][:L]
    for blk in tp["blocks"]:
        x = _residual_block(x, blk, cfg["heads"], causal=True)
    x = pallas_layernorm(x.reshape(N * L, D), tp["ln_final_g"], tp["ln_final_b"]
                         ).reshape(N, L, D)
    eot = jnp.argmax(text, axis=-1)                   # pool_type='argmax' (EOT id is max)
    pooled = x[jnp.arange(N), eot]                    # (N, D)
    pooled = pallas_linear(pooled, tp["proj"], out_dtype=jnp.float32)  # (N, E)
    return pooled


def custom_text_clip_forward(image, text, params):
    img_f = encode_image(image, params["visual"], params["vision_cfg"])
    txt_f = encode_text(text, params["text"], params["text_cfg"])
    img_f = pallas_l2_normalize(img_f)
    txt_f = pallas_l2_normalize(txt_f)
    return img_f, txt_f, jnp.exp(params["logit_scale"])


# ------------------------------ Param init ---------------------------------
# Weights / embeddings are stored in bf16 at init ("load") time; biases and
# LayerNorm affine params stay f32 and are pre-shaped (1, D) for the kernels.

def _init_block(key, width, mlp_width):
    ks = jax.random.split(key, 4)
    s = 0.02

    def w(k, shape):
        return (s * jax.random.normal(k, shape, jnp.float32)).astype(jnp.bfloat16)

    return {
        "ln1_g": jnp.ones((1, width), jnp.float32),
        "ln1_b": jnp.zeros((1, width), jnp.float32),
        "qkv_w": w(ks[0], (width, 3 * width)),
        "qkv_b": jnp.zeros((3 * width,), jnp.float32),
        "out_w": w(ks[1], (width, width)),
        "out_b": jnp.zeros((width,), jnp.float32),
        "ln2_g": jnp.ones((1, width), jnp.float32),
        "ln2_b": jnp.zeros((1, width), jnp.float32),
        "fc1_w": w(ks[2], (width, mlp_width)),
        "fc1_b": jnp.zeros((mlp_width,), jnp.float32),
        "fc2_w": w(ks[3], (mlp_width, width)),
        "fc2_b": jnp.zeros((width,), jnp.float32),
    }


def init_params(key, embed_dim, vision_cfg, text_cfg):
    kv, kt = jax.random.split(key)
    s = 0.02

    def w(k, shape):
        return (s * jax.random.normal(k, shape, jnp.float32)).astype(jnp.bfloat16)

    # ----- vision tower -----
    p = vision_cfg["patch_size"]
    C = vision_cfg["channels"]
    D = vision_cfg["width"]
    grid = vision_cfg["image_size"] // p
    L_v = grid * grid + 1
    kvs = jax.random.split(kv, 4 + vision_cfg["layers"])
    visual = {
        "patch_w": w(kvs[0], (C * p * p, D)),
        "cls": w(kvs[1], (D,)),
        "pos": w(kvs[2], (L_v, D)),
        "ln_pre_g": jnp.ones((1, D), jnp.float32), "ln_pre_b": jnp.zeros((1, D), jnp.float32),
        "ln_post_g": jnp.ones((1, D), jnp.float32), "ln_post_b": jnp.zeros((1, D), jnp.float32),
        "proj": w(kvs[3], (D, embed_dim)),
        "blocks": [_init_block(kvs[4 + i], D, int(D * vision_cfg["mlp_ratio"]))
                   for i in range(vision_cfg["layers"])],
    }
    # ----- text tower -----
    Dt = text_cfg["width"]
    kts = jax.random.split(kt, 3 + text_cfg["layers"])
    text = {
        "tok_emb": w(kts[0], (text_cfg["vocab_size"], Dt)),
        "pos": w(kts[1], (text_cfg["context_length"], Dt)),
        "ln_final_g": jnp.ones((1, Dt), jnp.float32), "ln_final_b": jnp.zeros((1, Dt), jnp.float32),
        "proj": w(kts[2], (Dt, embed_dim)),
        "blocks": [_init_block(kts[3 + i], Dt, int(Dt * text_cfg["mlp_ratio"]))
                   for i in range(text_cfg["layers"])],
    }
    return {
        "visual": visual,
        "text": text,
        "vision_cfg": vision_cfg,
        "text_cfg": text_cfg,
        "logit_scale": jnp.float32(math.log(1.0 / 0.07)),
    }


# ---------------------------------- main ------------------------------------

if __name__ == "__main__":
    embed_dim = 32
    vision_cfg = dict(image_size=16, patch_size=8, width=32, layers=2, heads=2,
                      mlp_ratio=4.0, channels=3)
    text_cfg = dict(context_length=8, vocab_size=64, width=32, layers=2, heads=2,
                    mlp_ratio=4.0)

    key = jax.random.PRNGKey(0)
    k_param, k_img, k_txt = jax.random.split(key, 3)
    params = init_params(k_param, embed_dim, vision_cfg, text_cfg)

    image = jax.random.normal(k_img, (2, 3, 16, 16), jnp.float32)   # NCHW
    text = jax.random.randint(k_txt, (2, 8), 1, text_cfg["vocab_size"]).astype(jnp.int32)

    img_f, txt_f, logit_scale = custom_text_clip_forward(image, text, params)
    jax.block_until_ready((img_f, txt_f, logit_scale))

    assert img_f.shape == (2, embed_dim) and txt_f.shape == (2, embed_dim)
    # TODO(synk): logit_bias / output_dict branches are parameter-less pass-throughs; omitted.
    print("KERNEL_OK")
</pallas_src>

<mosaic_0001>
module attributes {stable_mosaic.version = 11 : i64} {
  func.func @_linear_kernel(%arg0: i32, %arg1: i32, %arg2: i32, %arg3: memref<8x192xf32, #tpu.memory_space<vmem>>, %arg4: memref<192x32xbf16, #tpu.memory_space<vmem>>, %arg5: memref<8x32xbf16, #tpu.memory_space<vmem>>, %arg6: memref<8x32xf32, #tpu.memory_space<vmem>>) attributes {dimension_semantics = [#tpu.dimension_semantics<parallel>, #tpu.dimension_semantics<parallel>, #tpu.dimension_semantics<arbitrary>], iteration_bounds = array<i64: 1, 1, 1>, scalar_prefetch = 0 : i64, scratch_operands = 1 : i64, tpu.core_type = #tpu.core_type<tc>, window_params = [{transform_indices = @transform_0, window_bounds = array<i64: 8, 192>}, {transform_indices = @transform_1, window_bounds = array<i64: 192, 32>}, {transform_indices = @transform_2, window_bounds = array<i64: 8, 32>}]} {
    %c0_i32 = arith.constant 0 : i32
    %0 = arith.cmpi eq, %arg2, %c0_i32 : i32
    %1 = arith.extui %0 : i1 to i32
    %c0_i32_0 = arith.constant 0 : i32
    %2 = arith.cmpi ne, %1, %c0_i32_0 : i32
    scf.if %2 {
      %cst_10 = arith.constant 0.000000e+00 : f32
      %13 = vector.broadcast %cst_10 : f32 to vector<8x32xf32>
      %c0_11 = arith.constant 0 : index
      %c0_12 = arith.constant 0 : index
      %14 = vector.load %arg6[%c0_11, %c0_12] : memref<8x32xf32, #tpu.memory_space<vmem>>, vector<8x32xf32>
      tpu.vector_store %arg6[%c0_11, %c0_12], %13 {strides = array<i32>} : memref<8x32xf32, #tpu.memory_space<vmem>>, vector<8x32xf32>,
    } else {
    }
    %c0 = arith.constant 0 : index
    %c0_1 = arith.constant 0 : index
    %3 = vector.load %arg3[%c0, %c0_1] : memref<8x192xf32, #tpu.memory_space<vmem>>, vector<8x192xf32>
    %4 = arith.truncf %3 : vector<8x192xf32> to vector<8x192xbf16>
    %c0_2 = arith.constant 0 : index
    %c0_3 = arith.constant 0 : index
    %5 = vector.load %arg6[%c0_2, %c0_3] : memref<8x32xf32, #tpu.memory_space<vmem>>, vector<8x32xf32>
    %c0_4 = arith.constant 0 : index
    %c0_5 = arith.constant 0 : index
    %6 = vector.load %arg4[%c0_4, %c0_5] : memref<192x32xbf16, #tpu.memory_space<vmem>>, vector<192x32xbf16>
    %cst = arith.constant dense<0.000000e+00> : vector<8x32xf32>
    %7 = tpu.matmul %4, %6, %cst {dimension_numbers = #tpu.dot_dimension_numbers<[1], [0], [0], [1], [0, 0, 1, 1], [], []>} : vector<8x192xbf16>, vector<192x32xbf16>, vector<8x32xf32> -> vector<8x32xf32>
    %8 = arith.addf %5, %7 : vector<8x32xf32>
    %c0_6 = arith.constant 0 : index
    %c0_7 = arith.constant 0 : index
    %9 = vector.load %arg6[%c0_6, %c0_7] : memref<8x32xf32, #tpu.memory_space<vmem>>, vector<8x32xf32>
    tpu.vector_store %arg6[%c0_6, %c0_7], %8 {strides = array<i32>} : memref<8x32xf32, #tpu.memory_space<vmem>>, vector<8x32xf32>,
    %c0_i32_8 = arith.constant 0 : i32
    %10 = arith.cmpi eq, %arg2, %c0_i32_8 : i32
    %11 = arith.extui %10 : i1 to i32
    %c0_i32_9 = arith.constant 0 : i32
    %12 = arith.cmpi ne, %11, %c0_i32_9 : i32
    scf.if %12 {
      %c0_10 = arith.constant 0 : index
      %c0_11 = arith.constant 0 : index
      %13 = vector.load %arg6[%c0_10, %c0_11] : memref<8x32xf32, #tpu.memory_space<vmem>>, vector<8x32xf32>
      %14 = arith.truncf %13 : vector<8x32xf32> to vector<8x32xbf16>
      %c0_12 = arith.constant 0 : index
      %c0_13 = arith.constant 0 : index
      %15 = vector.load %arg5[%c0_12, %c0_13] : memref<8x32xbf16, #tpu.memory_space<vmem>>, vector<8x32xbf16>
      tpu.vector_store %arg5[%c0_12, %c0_13], %14 {strides = array<i32>} : memref<8x32xbf16, #tpu.memory_space<vmem>>, vector<8x32xbf16>,
    } else {
    }
    return
  }
  func.func @transform_0(%arg0: i32, %arg1: i32, %arg2: i32) -> (i32, i32) {
    %c0_i32 = arith.constant 0 : i32
    return %arg0, %arg2 : i32, i32
  }
  func.func @transform_1(%arg0: i32, %arg1: i32, %arg2: i32) -> (i32, i32) {
    %c0_i32 = arith.constant 0 : i32
    return %arg2, %arg1 : i32, i32
  }
  func.func @transform_2(%arg0: i32, %arg1: i32, %arg2: i32) -> (i32, i32) {
    %c0_i32 = arith.constant 0 : i32
    return %arg0, %arg1 : i32, i32
  }
}

</mosaic_0001>

<llo_original>
// kernel: tpu_custom_call.1
$region0: #{tpu_custom_call.1}
  #allocation0 [shape = 'u32[]', space=smem, size = 0x4, offset = 0x4, fixed_abs, tag = 'smem constant byte address 0x4 - core index']
  #allocation1 [shape = 'u32[144,128]{1,0:T(1,128)}', space=vmem, size = 0x12000, scoped, tag = 'internal scratch']
  #allocation2 [shape = 'f32[8,32]{1,0:T(8,128)}', space=vmem, size = 0x1000, scoped, tag = 'scratch operand']
  %s0 = inlined_call_operand.vmem [shape: f32[8,192], index: 0, kind: input, shape index: {}]
  %s1 = inlined_call_operand.vmem [shape: bf16[192,32], index: 1, kind: input, shape index: {}]
  %s2 = inlined_call_operand.hbm [shape: bf16[8,32], index: 2, kind: output, shape index: {}]
  %s3 = sld [smem:[#allocation0]]
  $region26: #{tpu_custom_call.1} parent=0
    _
  %s5 = ssub.s32 1, %s3
  %s6 = scalar_select 0, %s5, %s3
  $region1: #{tpu_custom_call.1} parent=0
    #allocation3 [shape = 'u8[2048]{0}', space=vmem, size = 0x800, scoped, tag = 'output window, operand 0, single buffered']
    #allocation4 [shape = 's32[1]{0}', space=sflag, size = 0x4, scoped, tag = 'scoped memory for tpu_custom_call.1']
    %7 = vsyncpa [#allocation4], 0
    // Predicated region
    $region2: #{tpu_custom_call.1} parent=1 // pred_check
      _
    $region3: #{tpu_custom_call.1} parent=1 // pred_check_branch
      %9 = sbr.rel (0) target = $region5
    $region4: #{tpu_custom_call.1} parent=1 // pred_region
      _
    $region5: #{tpu_custom_call.1} parent=1 // pred_fallthru
      _
    // Predicated region
    $region6: #{tpu_custom_call.1} parent=1 // pred_check
      _
    $region7: #{tpu_custom_call.1} parent=1 // pred_check_branch
      %11 = sbr.rel (0) target = $region9
    $region8: #{tpu_custom_call.1} parent=1 // pred_region
      _
    $region9: #{tpu_custom_call.1} parent=1 // pred_fallthru
      _
    %p13 = scmp.eq.s32.totalorder 0, 0
    // Predicated region
    $region10: #{tpu_custom_call.1} parent=1 // pred_check
      %p14 = pneg %p13
    $region11: #{tpu_custom_call.1} parent=1 // pred_check_branch
      %16 = sbr.rel (%p14) target = $region13
    $region12: #{tpu_custom_call.1} parent=1 // pred_region
      %vm17 = vcmask 261120
      %18 = vst.msk [vmem:[#allocation2] sm:$0xff] %vm17, 0.0
    $region13: #{tpu_custom_call.1} parent=1 // pred_fallthru
      _
    %v19 = vld [vmem:[%s0] sm:$0xff]
    %v20 = vld [vmem:[%s0 + $0x8] sm:$0xff]
    %v21 = vpack.c.bf16 %v19, %v19
    %v22 = vpack.c.bf16 %v20, %v20
    %v23 = vld [vmem:[#allocation2] sm:$0xff]
    %v24 = vld [vmem:[%s1] sm:$0xf]
    %v25 = vld [vmem:[%s1 + $0x4] sm:$0xf]
    %v26 = vld [vmem:[%s1 + $0x8] sm:$0xf]
    %v27 = vld [vmem:[%s1 + $0xc] sm:$0xf]
    %v28 = vld [vmem:[%s1 + $0x10] sm:$0xf]
    %v29 = vld [vmem:[%s1 + $0x14] sm:$0xf]
    %v30 = vld [vmem:[%s1 + $0x18] sm:$0xf]
    %v31 = vld [vmem:[%s1 + $0x1c] sm:$0xf]
    %v32 = vld [vmem:[%s1 + $0x20] sm:$0xf]
    %v33 = vld [vmem:[%s1 + $0x24] sm:$0xf]
    %v34 = vld [vmem:[%s1 + $0x28] sm:$0xf]
    %v35 = vld [vmem:[%s1 + $0x2c] sm:$0xf]
    %v36 = vld [vmem:[%s1 + $0x30] sm:$0xf]
    %v37 = vld [vmem:[%s1 + $0x34] sm:$0xf]
    %v38 = vld [vmem:[%s1 + $0x38] sm:$0xf]
    %v39 = vld [vmem:[%s1 + $0x3c] sm:$0xf]
    %v40 = vld [vmem:[%s1 + $0x40] sm:$0xf]
    %v41 = vld [vmem:[%s1 + $0x44] sm:$0xf]
    %v42 = vld [vmem:[%s1 + $0x48] sm:$0xf]
    %v43 = vld [vmem:[%s1 + $0x4c] sm:$0xf]
    %v44 = vld [vmem:[%s1 + $0x50] sm:$0xf]
    %v45 = vld [vmem:[%s1 + $0x54] sm:$0xf]
    %v46 = vld [vmem:[%s1 + $0x58] sm:$0xf]
    %v47 = vld [vmem:[%s1 + $0x5c] sm:$0xf]
    %v72 = vunpack.c.l.b16 %v24
    %v73 = vunpack.c.l.b16 %v25
    %v74 = vunpack.c.l.b16 %v26
    %v75 = vunpack.c.l.b16 %v27
    %v76 = vunpack.c.l.b16 %v28
    %v77 = vunpack.c.l.b16 %v29
    %v78 = vunpack.c.l.b16 %v30
    %v79 = vunpack.c.l.b16 %v31
    %v80 = vunpack.c.l.b16 %v32
    %v81 = vunpack.c.l.b16 %v33
    %v82 = vunpack.c.l.b16 %v34
    %v83 = vunpack.c.l.b16 %v35
    %v84 = vunpack.c.l.b16 %v36
    %v85 = vunpack.c.l.b16 %v37
    %v86 = vunpack.c.l.b16 %v38
    %v87 = vunpack.c.l.b16 %v39
    %v88 = vunpack.c.l.b16 %v40
    %v89 = vunpack.c.l.b16 %v41
    %v90 = vunpack.c.l.b16 %v42
    %v91 = vunpack.c.l.b16 %v43
    %v92 = vunpack.c.l.b16 %v44
    %v93 = vunpack.c.l.b16 %v45
    %v94 = vunpack.c.l.b16 %v46
    %v95 = vunpack.c.l.b16 %v47
    %v96 = vpack.c.b16 %v73, %v72
    %v97 = vpack.c.b16 %v75, %v74
    %v98 = vpack.c.b16 %v77, %v76
    %v99 = vpack.c.b16 %v79, %v78
    %v100 = vpack.c.b16 %v81, %v80
    %v101 = vpack.c.b16 %v83, %v82
    %v102 = vpack.c.b16 %v85, %v84
    %v103 = vpack.c.b16 %v87, %v86
    %v104 = vpack.c.b16 %v89, %v88
    %v105 = vpack.c.b16 %v91, %v90
    %v106 = vpack.c.b16 %v93, %v92
    %v107 = vpack.c.b16 %v95, %v94
    %vm120 = vcmask 523264
    %v122 = vsel %vm120, %v22, 0
    %124 = vmatprep.subr.bf16.mxu0 0
    %125 = vmatpush1.bf16.msra.mxu0 %v103
    %126 = vmatprep.subr.bf16.mxu0 0
    %127 = vmatpush1.bf16.msra.mxu0 %v102
    %128 = vmatprep.subr.bf16.mxu0 0
    %129 = vmatpush1.bf16.msra.mxu0 %v101
    %130 = vmatprep.subr.bf16.mxu0 0
    %131 = vmatpush1.bf16.msra.mxu0 %v100
    %132 = vmatprep.subr.bf16.mxu0 0
    %133 = vmatpush1.bf16.msra.mxu0 %v99
    %134 = vmatprep.subr.bf16.mxu0 0
    %135 = vmatpush1.bf16.msra.mxu0 %v98
    %136 = vmatprep.subr.bf16.mxu0 0
    %137 = vmatpush1.bf16.msra.mxu0 %v97
    %138 = vmatprep.subr.bf16.mxu0 0
    %139 = vmatpush1.bf16.msra.mxu0 %v96
    %140 = vmatprep.subr.bf16.mxu0 0
    %141 = vmatpush2.bf16.msra.mxu0 0
    %142 = vmatprep.subr.bf16.mxu0 0
    %143 = vmatpush2.bf16.msra.mxu0 0
    %144 = vmatprep.subr.bf16.mxu0 0
    %145 = vmatpush2.bf16.msra.mxu0 0
    %146 = vmatprep.subr.bf16.mxu0 0
    %147 = vmatpush2.bf16.msra.mxu0 0
    %148 = vmatprep.subr.bf16.mxu0 0
    %149 = vmatpush2.bf16.msra.mxu0 %v107
    %150 = vmatprep.subr.bf16.mxu0 0
    %151 = vmatpush2.bf16.msra.mxu0 %v106
    %152 = vmatprep.subr.bf16.mxu0 0
    %153 = vmatpush2.bf16.msra.mxu0 %v105
    %154 = vmatprep.subr.bf16.mxu0 0
    %155 = vmatpush2.bf16.msra.mxu0 %v104
    %156 = vmatprep.mubr.bf16.mxu0 %v122
    %157 = vmatmul.mubr.bf16.gmra.mxu0 %v21
    %v158 = vpop.f32.mrf.mxu0
    %v159 = vadd.f32 0.0, %v158
    %v160 = vpop.f32.mrf.mxu0
    %v161 = vpop.f32.mrf.mxu0
    %v162 = vpop.f32.mrf.mxu0
    %163 = vdwg.mxu0
    %v164 = vadd.f32 %v23, %v159
    %vm165 = vcmask 261120
    %166 = vst.msk [vmem:[#allocation2] sm:$0xff] %vm165, %v164
    // Predicated region
    $region14: #{tpu_custom_call.1} parent=1 // pred_check
      %p167 = pneg %p13
    $region15: #{tpu_custom_call.1} parent=1 // pred_check_branch
      %169 = sbr.rel (%p167) target = $region17
    $region16: #{tpu_custom_call.1} parent=1 // pred_region
      %v170 = vld [vmem:[#allocation2] sm:$0xff]
      %v171 = vpack.c.bf16 %v170, %v170
      %vm172 = vcmask 257024
      %173 = vst.msk [vmem:[#allocation3] sm:$0xf] %vm172, %v171
    $region17: #{tpu_custom_call.1} parent=1 // pred_fallthru
      _
    // Predicated region
    $region18: #{tpu_custom_call.1} parent=1 // pred_check
      _
    $region19: #{tpu_custom_call.1} parent=1 // pred_check_branch
      %175 = sbr.rel (0) target = $region21
    $region20: #{tpu_custom_call.1} parent=1 // pred_region
      %s177 = ssub.s32 64, 64
      %178 = vsyncadd [#allocation4], %s177
      %s180 = sshll.u32 [#allocation3], 4
      %s181 = int_to_ptr.vmem [resolvable:$true] %s180
      %183 = dma.vmem_to_hbm [thread:$0]  %s181, 64, %s2, [#allocation4]
    $region21: #{tpu_custom_call.1} parent=1 // pred_fallthru
      _
    // Predicated region
    $region22: #{tpu_custom_call.1} parent=1 // pred_check
      _
    $region23: #{tpu_custom_call.1} parent=1 // pred_check_branch
      %185 = sbr.rel (0) target = $region25
    $region24: #{tpu_custom_call.1} parent=1 // pred_region
      %186 = dma.done [#allocation4], 64
    $region25: #{tpu_custom_call.1} parent=1 // pred_fallthru
      _
    %187 = vsyncpa [#allocation4], 1

</llo_original>
